<compile_context>
chip_gen: v5e
topology: v5e:2x2
jax: 0.10.0
libtpu: 0.0.40
codegen_flags: <defaults>
</compile_context>

<pallas_src>
import functools

import jax
import jax.numpy as jnp
from jax.experimental import pallas as pl
from jax.experimental.pallas import tpu as pltpu


def _cdiv(a, b):
    return (a + b - 1) // b


def _round_up(a, b):
    return _cdiv(a, b) * b


# Conservative budget for the double-buffered feature block: fits v7x's
# 64 MiB VMEM with headroom while keeping v5e/v6e at the HBM roofline.
_FEATURE_VMEM_BUDGET = 24 * 1024 * 1024
_MAX_ROW_TILE = 1024


def _choose_row_tile(rows, length, itemsize):
    """Largest row tile (multiple of 8) fitting the VMEM budget, but keep
    >= ~4 grid steps when possible so v7x can shard rows across its two
    TensorCores and the DMA pipeline has iterations to overlap."""
    if rows < 8:
        return rows                          # block == full dim: legal, no padding
    pos_bytes = 2 * length * 128 * 4         # double-buffered pos matrix
    budget = max(_FEATURE_VMEM_BUDGET - pos_bytes, 2 * 8 * length * itemsize)
    per_row = 2 * length * itemsize          # double-buffered feature rows
    tile = min(_MAX_ROW_TILE, max(8, (budget // per_row) // 8 * 8))
    tile = min(tile, _round_up(rows, 8))
    if rows >= 32:                           # leave >= ~4 grid steps
        tile = min(tile, max(8, _round_up(_cdiv(rows, 4), 8)))
    return max(8, tile // 8 * 8)


def _spatial_softmax_kernel(feat_ref, pos_ref, out_ref, *, inv_temperature):
    # feat_ref: (TR, L)   pos_ref: (L, 128) with cols [pos_x, pos_y, 1, 0...]
    # out_ref:  (TR, 2)   -> [expected_x, expected_y] per row
    f = feat_ref[...].astype(jnp.float32) * inv_temperature
    m = jnp.max(f, axis=-1, keepdims=True)             # only XLU reduction
    e = jnp.exp(f - m)                                  # unnormalised softmax (EUP)
    # One MXU matmul yields [sum(pos_x*e), sum(pos_y*e), sum(e), 0...] per row.
    s = jnp.dot(e, pos_ref[...],
                preferred_element_type=jnp.float32,
                precision=jax.lax.Precision.HIGHEST)    # (TR, 128)
    inv_denom = pl.reciprocal(s[:, 2:3], approx=False)  # exact, only (TR, 1)
    out_ref[...] = (s[:, 0:2] * inv_denom).astype(out_ref.dtype)


def spatial_softmax(feature, pos_x, pos_y, *, height, width, channel,
                    temperature=1.0, row_tile=None):
    """feature: (N, C, H, W) -> (N, 2*C) keypoints (matches SpatialSoftmax)."""
    n, c, h, w = feature.shape
    assert h == height and w == width and c == channel
    rows = n * c
    length = h * w
    feat2d = feature.reshape(rows, length)       # pure reshape, no padded copy

    # Constant reduction matrix: col0 = pos_x, col1 = pos_y, col2 = 1, rest 0.
    pmat = jnp.stack([pos_x.reshape(length).astype(jnp.float32),
                      pos_y.reshape(length).astype(jnp.float32),
                      jnp.ones((length,), jnp.float32)], axis=1)   # (L, 3)
    pmat = jnp.pad(pmat, ((0, 0), (0, 128 - 3)))                    # (L, 128)

    itemsize = jnp.dtype(feat2d.dtype).itemsize
    if row_tile is None:
        row_tile = _choose_row_tile(rows, length, itemsize)
    grid = (_cdiv(rows, row_tile),)              # partial last block is masked

    vmem_limit = (2 * row_tile * length * itemsize   # feature double-buffer
                  + 2 * length * 128 * 4             # pos-matrix double-buffer
                  + 2 * 2 * row_tile * 4             # output double-buffer
                  + (4 << 20))                       # compiler scratch slack
    vmem_limit = int(min(max(vmem_limit, 16 << 20), 64 << 20))

    # TODO(synk): a learned `temperature` Parameter would be passed as an SMEM
    # scalar instead of being baked in as a static constant.
    kernel = functools.partial(_spatial_softmax_kernel,
                               inv_temperature=1.0 / float(temperature))

    out = pl.pallas_call(
        kernel,
        out_shape=jax.ShapeDtypeStruct((rows, 2), jnp.float32),
        grid_spec=pltpu.PrefetchScalarGridSpec(
            num_scalar_prefetch=0,
            grid=grid,
            in_specs=[
                pl.BlockSpec((row_tile, length), lambda i: (i, 0)),
                pl.BlockSpec((length, 128), lambda i: (0, 0)),
            ],
            out_specs=pl.BlockSpec((row_tile, 2), lambda i: (i, 0)),
        ),
        compiler_params=pltpu.CompilerParams(
            dimension_semantics=("parallel",),
            vmem_limit_bytes=vmem_limit),
    )(feat2d, pmat)

    # torch.cat([expected_x, expected_y], 1).view(-1, channel*2):
    # per-channel interleaved (x, y) pairs -- already laid out as (rows, 2).
    return out.reshape(n, c * 2)


def make_pos_grids(height, width):
    # Intentionally reproduces the PyTorch buffer construction:
    # np.meshgrid(linspace(-1,1,H), linspace(-1,1,W)) with default 'xy'
    # indexing -> arrays of shape (W, H), flattened to (H*W,).
    lin_h = jnp.linspace(-1.0, 1.0, height)
    lin_w = jnp.linspace(-1.0, 1.0, width)
    pos_x, pos_y = jnp.meshgrid(lin_h, lin_w)    # shapes (W, H)
    return (pos_x.reshape(height * width).astype(jnp.float32),
            pos_y.reshape(height * width).astype(jnp.float32))


def spatial_softmax_reference(feature, pos_x, pos_y, *, channel, temperature=1.0):
    n, c, h, w = feature.shape
    f = feature.reshape(-1, h * w) / temperature
    p = jax.nn.softmax(f, axis=-1)
    ex = jnp.sum(pos_x[None, :] * p, axis=1, keepdims=True)
    ey = jnp.sum(pos_y[None, :] * p, axis=1, keepdims=True)
    return jnp.concatenate([ex, ey], axis=1).reshape(-1, channel * 2)


if __name__ == "__main__":
    N, C, H, W = 2, 4, 16, 16
    key = jax.random.PRNGKey(0)
    x = jax.random.normal(key, (N, C, H, W), dtype=jnp.float32)

    pos_x, pos_y = make_pos_grids(H, W)          # deterministic "buffers"

    out = spatial_softmax(x, pos_x, pos_y, height=H, width=W, channel=C,
                          temperature=1.0)
    out = jax.block_until_ready(out)

    ref = spatial_softmax_reference(x, pos_x, pos_y, channel=C, temperature=1.0)
    assert out.shape == (N, 2 * C), out.shape
    assert jnp.allclose(out, ref, atol=1e-5, rtol=1e-5), (out, ref)

    print("KERNEL_OK")
</pallas_src>

<mosaic_0001>
module attributes {stable_mosaic.version = 11 : i64} {
  func.func @_spatial_softmax_kernel(%arg0: i32, %arg1: memref<8x256xf32, #tpu.memory_space<vmem>>, %arg2: memref<256x128xf32, #tpu.memory_space<vmem>>, %arg3: memref<8x2xf32, #tpu.memory_space<vmem>>) attributes {dimension_semantics = [#tpu.dimension_semantics<parallel>], iteration_bounds = array<i64: 1>, scalar_prefetch = 0 : i64, scratch_operands = 0 : i64, tpu.core_type = #tpu.core_type<tc>, window_params = [{transform_indices = @transform_0, window_bounds = array<i64: 8, 256>}, {pipeline_mode = #tpu.pipeline_mode<synchronous>, transform_indices = @transform_1, window_bounds = array<i64: 256, 128>}, {transform_indices = @transform_2, window_bounds = array<i64: 8, 2>}]} {
    %c0 = arith.constant 0 : index
    %c0_0 = arith.constant 0 : index
    %0 = vector.load %arg1[%c0, %c0_0] : memref<8x256xf32, #tpu.memory_space<vmem>>, vector<8x256xf32>
    %cst = arith.constant 1.000000e+00 : f32
    %1 = vector.broadcast %cst : f32 to vector<8x256xf32>
    %2 = arith.mulf %0, %1 : vector<8x256xf32>
    %cst_1 = arith.constant dense<0xFF800000> : vector<8xf32>
    %3 = vector.multi_reduction <maximumf>, %2, %cst_1 [1] : vector<8x256xf32> to vector<8xf32>
    %4 = vector.shape_cast %3 : vector<8xf32> to vector<8x1xf32>
    %5 = vector.broadcast %4 : vector<8x1xf32> to vector<8x256xf32>
    %6 = arith.subf %2, %5 : vector<8x256xf32>
    %7 = math.exp %6 : vector<8x256xf32>
    %c0_2 = arith.constant 0 : index
    %c0_3 = arith.constant 0 : index
    %8 = vector.load %arg2[%c0_2, %c0_3] : memref<256x128xf32, #tpu.memory_space<vmem>>, vector<256x128xf32>
    %cst_4 = arith.constant dense<0.000000e+00> : vector<8x128xf32>
    %9 = tpu.matmul %7, %8, %cst_4 {dimension_numbers = #tpu.dot_dimension_numbers<[1], [0], [0], [1], [0, 0, 1, 1], [], []>, precision = #tpu.contract_precision<fp32>} : vector<8x256xf32>, vector<256x128xf32>, vector<8x128xf32> -> vector<8x128xf32>
    %10 = vector.extract_strided_slice %9 {offsets = [0, 2], sizes = [8, 1], strides = [1, 1]} : vector<8x128xf32> to vector<8x1xf32>
    %11 = tpu.reciprocal %10 : vector<8x1xf32> -> vector<8x1xf32>
    %12 = vector.extract_strided_slice %9 {offsets = [0, 0], sizes = [8, 2], strides = [1, 1]} : vector<8x128xf32> to vector<8x2xf32>
    %13 = vector.broadcast %11 : vector<8x1xf32> to vector<8x2xf32>
    %14 = arith.mulf %12, %13 : vector<8x2xf32>
    %c0_5 = arith.constant 0 : index
    %c0_6 = arith.constant 0 : index
    %15 = vector.load %arg3[%c0_5, %c0_6] : memref<8x2xf32, #tpu.memory_space<vmem>>, vector<8x2xf32>
    tpu.vector_store %arg3[%c0_5, %c0_6], %14 {strides = array<i32>} : memref<8x2xf32, #tpu.memory_space<vmem>>, vector<8x2xf32>,
    return
  }
  func.func @transform_0(%arg0: i32) -> (i32, i32) {
    %c0_i32 = arith.constant 0 : i32
    %c0_i32_0 = arith.constant 0 : i32
    return %arg0, %c0_i32 : i32, i32
  }
  func.func @transform_1(%arg0: i32) -> (i32, i32) {
    %c0_i32 = arith.constant 0 : i32
    %c0_i32_0 = arith.constant 0 : i32
    %c0_i32_1 = arith.constant 0 : i32
    return %c0_i32, %c0_i32_0 : i32, i32
  }
  func.func @transform_2(%arg0: i32) -> (i32, i32) {
    %c0_i32 = arith.constant 0 : i32
    %c0_i32_0 = arith.constant 0 : i32
    return %arg0, %c0_i32 : i32, i32
  }
}

</mosaic_0001>

<llo_original>
// kernel: tpu_custom_call.1
$region0: #{tpu_custom_call.1}
  #allocation0 [shape = 'u32[]', space=smem, size = 0x4, offset = 0x4, fixed_abs, tag = 'smem constant byte address 0x4 - core index']
  #allocation1 [shape = 'u32[72,128]{1,0:T(1,128)}', space=vmem, size = 0x9000, scoped, tag = 'internal scratch']
  %s0 = inlined_call_operand.hbm [shape: f32[8,256], index: 0, kind: input, shape index: {}]
  %s1 = inlined_call_operand.hbm [shape: f32[256,128], index: 1, kind: input, shape index: {}]
  %s2 = inlined_call_operand.vmem [shape: f32[8,2], index: 2, kind: output, shape index: {}]
  %s3 = sld [smem:[#allocation0]]
  $region26: #{tpu_custom_call.1} parent=0
    _
  %s5 = ssub.s32 1, %s3
  %s6 = scalar_select 0, %s5, %s3
  $region1: #{tpu_custom_call.1} parent=0
    #allocation2 [shape = 'u8[8192]{0}', space=vmem, size = 0x2000, scoped, tag = 'input window, operand 0, single buffered']
    #allocation3 [shape = 's32[1]{0}', space=sflag, size = 0x4, scoped, tag = 'scoped memory for tpu_custom_call.1']
    #allocation4 [shape = 'u8[131072]{0}', space=vmem, size = 0x20000, scoped, tag = 'input window, operand 1, single buffered']
    #allocation5 [shape = 's32[1]{0}', space=sflag, size = 0x4, scoped, tag = 'scoped memory for tpu_custom_call.1']
    %7 = vsyncpa [#allocation3], 0
    %8 = vsyncpa [#allocation5], 0
    // Predicated region
    $region2: #{tpu_custom_call.1} parent=1 // pred_check
      _
    $region3: #{tpu_custom_call.1} parent=1 // pred_check_branch
      %10 = sbr.rel (0) target = $region5
    $region4: #{tpu_custom_call.1} parent=1 // pred_region
      %12 = vsyncadd [#allocation3], 0
      %s14 = sshll.u32 %s0, 4
      %s15 = int_to_ptr.hbm [resolvable:$true] %s14
      %s16 = sshll.u32 [#allocation2], 4
      %s17 = int_to_ptr.vmem [resolvable:$true] %s16
      %19 = dma.hbm_to_vmem [thread:$0]  %s15, 256, %s17, [#allocation3]
    $region5: #{tpu_custom_call.1} parent=1 // pred_fallthru
      _
    // Predicated region
    $region6: #{tpu_custom_call.1} parent=1 // pred_check
      _
    $region7: #{tpu_custom_call.1} parent=1 // pred_check_branch
      %21 = sbr.rel (0) target = $region9
    $region8: #{tpu_custom_call.1} parent=1 // pred_region
      %23 = vsyncadd [#allocation5], 0
      %s24 = sshll.u32 %s1, 4
      %s25 = int_to_ptr.hbm [resolvable:$true] %s24
      %s26 = sshll.u32 [#allocation4], 4
      %s27 = int_to_ptr.vmem [resolvable:$true] %s26
      %32 = dma.hbm_to_vmem [thread:$0]  %s25, 4096, %s27, [#allocation5], 128, 128, 8
    $region9: #{tpu_custom_call.1} parent=1 // pred_fallthru
      _
    // Predicated region
    $region10: #{tpu_custom_call.1} parent=1 // pred_check
      _
    $region11: #{tpu_custom_call.1} parent=1 // pred_check_branch
      %34 = sbr.rel (0) target = $region13
    $region12: #{tpu_custom_call.1} parent=1 // pred_region
      %36 = dma.done [#allocation3], 256
    $region13: #{tpu_custom_call.1} parent=1 // pred_fallthru
      _
    // Predicated region
    $region14: #{tpu_custom_call.1} parent=1 // pred_check
      _
    $region15: #{tpu_custom_call.1} parent=1 // pred_check_branch
      %38 = sbr.rel (0) target = $region17
    $region16: #{tpu_custom_call.1} parent=1 // pred_region
      %40 = dma.done [#allocation5], 4096
    $region17: #{tpu_custom_call.1} parent=1 // pred_fallthru
      _
    %v41 = vld [vmem:[#allocation2] sm:$0xff]
    %v42 = vld [vmem:[#allocation2 + $0x8] sm:$0xff]
    %v43 = vmax.f32 %v41, %v42
    %44 = vmax.xlane.f32.xlu0 %v43
    %v45 = vpop.xlane.xlu0 %44
    %v46 = vsub.f32 %v41, %v45
    %v47 = vsub.f32 %v42, %v45
    %v48 = vmul.f32 %v46, 1.442695
    %v49 = vpow.pop %v48
    %v50 = vmul.f32 %v47, 1.442695
    %v51 = vpow.pop %v50
    %v52 = vld [vmem:[#allocation4] sm:$0xff]
    %v53 = vld [vmem:[#allocation4 + $0x8] sm:$0xff]
    %v54 = vld [vmem:[#allocation4 + $0x10] sm:$0xff]
    %v55 = vld [vmem:[#allocation4 + $0x18] sm:$0xff]
    %v56 = vld [vmem:[#allocation4 + $0x20] sm:$0xff]
    %v57 = vld [vmem:[#allocation4 + $0x28] sm:$0xff]
    %v58 = vld [vmem:[#allocation4 + $0x30] sm:$0xff]
    %v59 = vld [vmem:[#allocation4 + $0x38] sm:$0xff]
    %v60 = vld [vmem:[#allocation4 + $0x40] sm:$0xff]
    %v61 = vld [vmem:[#allocation4 + $0x48] sm:$0xff]
    %v62 = vld [vmem:[#allocation4 + $0x50] sm:$0xff]
    %v63 = vld [vmem:[#allocation4 + $0x58] sm:$0xff]
    %v64 = vld [vmem:[#allocation4 + $0x60] sm:$0xff]
    %v65 = vld [vmem:[#allocation4 + $0x68] sm:$0xff]
    %v66 = vld [vmem:[#allocation4 + $0x70] sm:$0xff]
    %v67 = vld [vmem:[#allocation4 + $0x78] sm:$0xff]
    %v68 = vld [vmem:[#allocation4 + $0x80] sm:$0xff]
    %v69 = vld [vmem:[#allocation4 + $0x88] sm:$0xff]
    %v70 = vld [vmem:[#allocation4 + $0x90] sm:$0xff]
    %v71 = vld [vmem:[#allocation4 + $0x98] sm:$0xff]
    %v72 = vld [vmem:[#allocation4 + $0xa0] sm:$0xff]
    %v73 = vld [vmem:[#allocation4 + $0xa8] sm:$0xff]
    %v74 = vld [vmem:[#allocation4 + $0xb0] sm:$0xff]
    %v75 = vld [vmem:[#allocation4 + $0xb8] sm:$0xff]
    %v76 = vld [vmem:[#allocation4 + $0xc0] sm:$0xff]
    %v77 = vld [vmem:[#allocation4 + $0xc8] sm:$0xff]
    %v78 = vld [vmem:[#allocation4 + $0xd0] sm:$0xff]
    %v79 = vld [vmem:[#allocation4 + $0xd8] sm:$0xff]
    %v80 = vld [vmem:[#allocation4 + $0xe0] sm:$0xff]
    %v81 = vld [vmem:[#allocation4 + $0xe8] sm:$0xff]
    %v82 = vld [vmem:[#allocation4 + $0xf0] sm:$0xff]
    %v83 = vld [vmem:[#allocation4 + $0xf8] sm:$0xff]
    %v84 = vand.u32 %v67, 4294901760
    %85 = vmatpush.msra.mxu0 %v84
    %v86 = vand.u32 %v66, 4294901760
    %87 = vmatpush.msra.mxu0 %v86
    %v88 = vand.u32 %v65, 4294901760
    %89 = vmatpush.msra.mxu0 %v88
    %v90 = vand.u32 %v64, 4294901760
    %91 = vmatpush.msra.mxu0 %v90
    %v92 = vand.u32 %v63, 4294901760
    %93 = vmatpush.msra.mxu0 %v92
    %v94 = vand.u32 %v62, 4294901760
    %95 = vmatpush.msra.mxu0 %v94
    %v96 = vand.u32 %v61, 4294901760
    %97 = vmatpush.msra.mxu0 %v96
    %v98 = vand.u32 %v60, 4294901760
    %99 = vmatpush.msra.mxu0 %v98
    %v100 = vand.u32 %v59, 4294901760
    %101 = vmatpush.msra.mxu0 %v100
    %v102 = vand.u32 %v58, 4294901760
    %103 = vmatpush.msra.mxu0 %v102
    %v104 = vand.u32 %v57, 4294901760
    %105 = vmatpush.msra.mxu0 %v104
    %v106 = vand.u32 %v56, 4294901760
    %107 = vmatpush.msra.mxu0 %v106
    %v108 = vand.u32 %v55, 4294901760
    %109 = vmatpush.msra.mxu0 %v108
    %v110 = vand.u32 %v54, 4294901760
    %111 = vmatpush.msra.mxu0 %v110
    %v112 = vand.u32 %v53, 4294901760
    %113 = vmatpush.msra.mxu0 %v112
    %v114 = vand.u32 %v52, 4294901760
    %115 = vmatpush.msra.mxu0 %v114
    %v116 = vand.u32 %v49, 4294901760
    %v117 = vsub.f32 %v49, %v116
    %v118 = vand.u32 %v117, 4294901760
    %v119 = vsub.f32 %v117, %v118
    %v120 = vand.u32 %v119, 4294901760
    %121 = vmatmul.f32.gmra.mxu0 %v120
    %v122 = vpop.f32.mrf.mxu0
    %v123 = vadd.f32 0.0, %v122
    %124 = vdwg.mxu0
    %v125 = vand.u32 %v67, 4294901760
    %v126 = vsub.f32 %v67, %v125
    %v127 = vand.u32 %v126, 4294901760
    %v128 = vsub.f32 %v126, %v127
    %v129 = vand.u32 %v128, 4294901760
    %130 = vmatpush.msra.mxu0 %v129
    %v131 = vand.u32 %v66, 4294901760
    %v132 = vsub.f32 %v66, %v131
    %v133 = vand.u32 %v132, 4294901760
    %v134 = vsub.f32 %v132, %v133
    %v135 = vand.u32 %v134, 4294901760
    %136 = vmatpush.msra.mxu0 %v135
    %v137 = vand.u32 %v65, 4294901760
    %v138 = vsub.f32 %v65, %v137
    %v139 = vand.u32 %v138, 4294901760
    %v140 = vsub.f32 %v138, %v139
    %v141 = vand.u32 %v140, 4294901760
    %142 = vmatpush.msra.mxu0 %v141
    %v143 = vand.u32 %v64, 4294901760
    %v144 = vsub.f32 %v64, %v143
    %v145 = vand.u32 %v144, 4294901760
    %v146 = vsub.f32 %v144, %v145
    %v147 = vand.u32 %v146, 4294901760
    %148 = vmatpush.msra.mxu0 %v147
    %v149 = vand.u32 %v63, 4294901760
    %v150 = vsub.f32 %v63, %v149
    %v151 = vand.u32 %v150, 4294901760
    %v152 = vsub.f32 %v150, %v151
    %v153 = vand.u32 %v152, 4294901760
    %154 = vmatpush.msra.mxu0 %v153
    %v155 = vand.u32 %v62, 4294901760
    %v156 = vsub.f32 %v62, %v155
    %v157 = vand.u32 %v156, 4294901760
    %v158 = vsub.f32 %v156, %v157
    %v159 = vand.u32 %v158, 4294901760
    %160 = vmatpush.msra.mxu0 %v159
    %v161 = vand.u32 %v61, 4294901760
    %v162 = vsub.f32 %v61, %v161
    %v163 = vand.u32 %v162, 4294901760
    %v164 = vsub.f32 %v162, %v163
    %v165 = vand.u32 %v164, 4294901760
    %166 = vmatpush.msra.mxu0 %v165
    %v167 = vand.u32 %v60, 4294901760
    %v168 = vsub.f32 %v60, %v167
    %v169 = vand.u32 %v168, 4294901760
    %v170 = vsub.f32 %v168, %v169
    %v171 = vand.u32 %v170, 4294901760
    %172 = vmatpush.msra.mxu0 %v171
    %v173 = vand.u32 %v59, 4294901760
    %v174 = vsub.f32 %v59, %v173
    %v175 = vand.u32 %v174, 4294901760
    %v176 = vsub.f32 %v174, %v175
    %v177 = vand.u32 %v176, 4294901760
    %178 = vmatpush.msra.mxu0 %v177
    %v179 = vand.u32 %v58, 4294901760
    %v180 = vsub.f32 %v58, %v179
    %v181 = vand.u32 %v180, 4294901760
    %v182 = vsub.f32 %v180, %v181
    %v183 = vand.u32 %v182, 4294901760
    %184 = vmatpush.msra.mxu0 %v183
    %v185 = vand.u32 %v57, 4294901760
    %v186 = vsub.f32 %v57, %v185
    %v187 = vand.u32 %v186, 4294901760
    %v188 = vsub.f32 %v186, %v187
    %v189 = vand.u32 %v188, 4294901760
    %190 = vmatpush.msra.mxu0 %v189
    %v191 = vand.u32 %v56, 4294901760
    %v192 = vsub.f32 %v56, %v191
    %v193 = vand.u32 %v192, 4294901760
    %v194 = vsub.f32 %v192, %v193
    %v195 = vand.u32 %v194, 4294901760
    %196 = vmatpush.msra.mxu0 %v195
    %v197 = vand.u32 %v55, 4294901760
    %v198 = vsub.f32 %v55, %v197
    %v199 = vand.u32 %v198, 4294901760
    %v200 = vsub.f32 %v198, %v199
    %v201 = vand.u32 %v200, 4294901760
    %202 = vmatpush.msra.mxu0 %v201
    %v203 = vand.u32 %v54, 4294901760
    %v204 = vsub.f32 %v54, %v203
    %v205 = vand.u32 %v204, 4294901760
    %v206 = vsub.f32 %v204, %v205
    %v207 = vand.u32 %v206, 4294901760
    %208 = vmatpush.msra.mxu0 %v207
    %v209 = vand.u32 %v53, 4294901760
    %v210 = vsub.f32 %v53, %v209
    %v211 = vand.u32 %v210, 4294901760
    %v212 = vsub.f32 %v210, %v211
    %v213 = vand.u32 %v212, 4294901760
    %214 = vmatpush.msra.mxu0 %v213
    %v215 = vand.u32 %v52, 4294901760
    %v216 = vsub.f32 %v52, %v215
    %v217 = vand.u32 %v216, 4294901760
    %v218 = vsub.f32 %v216, %v217
    %v219 = vand.u32 %v218, 4294901760
    %220 = vmatpush.msra.mxu0 %v219
    %v221 = vand.u32 %v49, 4294901760
    %222 = vmatmul.f32.gmra.mxu0 %v221
    %v223 = vpop.f32.mrf.mxu0
    %v224 = vadd.f32 %v123, %v223
    %225 = vdwg.mxu0
    %v226 = vand.u32 %v67, 4294901760
    %v227 = vsub.f32 %v67, %v226
    %228 = vmatpush.msra.mxu0 %v227
    %v229 = vand.u32 %v66, 4294901760
    %v230 = vsub.f32 %v66, %v229
    %231 = vmatpush.msra.mxu0 %v230
    %v232 = vand.u32 %v65, 4294901760
    %v233 = vsub.f32 %v65, %v232
    %234 = vmatpush.msra.mxu0 %v233
    %v235 = vand.u32 %v64, 4294901760
    %v236 = vsub.f32 %v64, %v235
    %237 = vmatpush.msra.mxu0 %v236
    %v238 = vand.u32 %v63, 4294901760
    %v239 = vsub.f32 %v63, %v238
    %240 = vmatpush.msra.mxu0 %v239
    %v241 = vand.u32 %v62, 4294901760
    %v242 = vsub.f32 %v62, %v241
    %243 = vmatpush.msra.mxu0 %v242
    %v244 = vand.u32 %v61, 4294901760
    %v245 = vsub.f32 %v61, %v244
    %246 = vmatpush.msra.mxu0 %v245
    %v247 = vand.u32 %v60, 4294901760
    %v248 = vsub.f32 %v60, %v247
    %249 = vmatpush.msra.mxu0 %v248
    %v250 = vand.u32 %v59, 4294901760
    %v251 = vsub.f32 %v59, %v250
    %252 = vmatpush.msra.mxu0 %v251
    %v253 = vand.u32 %v58, 4294901760
    %v254 = vsub.f32 %v58, %v253
    %255 = vmatpush.msra.mxu0 %v254
    %v256 = vand.u32 %v57, 4294901760
    %v257 = vsub.f32 %v57, %v256
    %258 = vmatpush.msra.mxu0 %v257
    %v259 = vand.u32 %v56, 4294901760
    %v260 = vsub.f32 %v56, %v259
    %261 = vmatpush.msra.mxu0 %v260
    %v262 = vand.u32 %v55, 4294901760
    %v263 = vsub.f32 %v55, %v262
    %264 = vmatpush.msra.mxu0 %v263
    %v265 = vand.u32 %v54, 4294901760
    %v266 = vsub.f32 %v54, %v265
    %267 = vmatpush.msra.mxu0 %v266
    %v268 = vand.u32 %v53, 4294901760
    %v269 = vsub.f32 %v53, %v268
    %270 = vmatpush.msra.mxu0 %v269
    %v271 = vand.u32 %v52, 4294901760
    %v272 = vsub.f32 %v52, %v271
    %273 = vmatpush.msra.mxu0 %v272
    %v274 = vand.u32 %v49, 4294901760
    %v275 = vsub.f32 %v49, %v274
    %276 = vmatmul.f32.gmra.mxu0 %v275
    %v277 = vpop.f32.mrf.mxu0
    %v278 = vadd.f32 %v224, %v277
    %279 = vdwg.mxu0
    %v280 = vand.u32 %v67, 4294901760
    %281 = vmatpush.msra.mxu0 %v280
    %v282 = vand.u32 %v66, 4294901760
    %283 = vmatpush.msra.mxu0 %v282
    %v284 = vand.u32 %v65, 4294901760
    %285 = vmatpush.msra.mxu0 %v284
    %v286 = vand.u32 %v64, 4294901760
    %287 = vmatpush.msra.mxu0 %v286
    %v288 = vand.u32 %v63, 4294901760
    %289 = vmatpush.msra.mxu0 %v288
    %v290 = vand.u32 %v62, 4294901760
    %291 = vmatpush.msra.mxu0 %v290
    %v292 = vand.u32 %v61, 4294901760
    %293 = vmatpush.msra.mxu0 %v292
    %v294 = vand.u32 %v60, 4294901760
    %295 = vmatpush.msra.mxu0 %v294
    %v296 = vand.u32 %v59, 4294901760
    %297 = vmatpush.msra.mxu0 %v296
    %v298 = vand.u32 %v58, 4294901760
    %299 = vmatpush.msra.mxu0 %v298
    %v300 = vand.u32 %v57, 4294901760
    %301 = vmatpush.msra.mxu0 %v300
    %v302 = vand.u32 %v56, 4294901760
    %303 = vmatpush.msra.mxu0 %v302
    %v304 = vand.u32 %v55, 4294901760
    %305 = vmatpush.msra.mxu0 %v304
    %v306 = vand.u32 %v54, 4294901760
    %307 = vmatpush.msra.mxu0 %v306
    %v308 = vand.u32 %v53, 4294901760
    %309 = vmatpush.msra.mxu0 %v308
    %v310 = vand.u32 %v52, 4294901760
    %311 = vmatpush.msra.mxu0 %v310
    %v312 = vand.u32 %v49, 4294901760
    %v313 = vsub.f32 %v49, %v312
    %v314 = vand.u32 %v313, 4294901760
    %315 = vmatmul.f32.gmra.mxu0 %v314
    %v316 = vpop.f32.mrf.mxu0
    %v317 = vadd.f32 %v278, %v316
    %318 = vdwg.mxu0
    %v319 = vand.u32 %v67, 4294901760
    %v320 = vsub.f32 %v67, %v319
    %v321 = vand.u32 %v320, 4294901760
    %322 = vmatpush.msra.mxu0 %v321
    %v323 = vand.u32 %v66, 4294901760
    %v324 = vsub.f32 %v66, %v323
    %v325 = vand.u32 %v324, 4294901760
    %326 = vmatpush.msra.mxu0 %v325
    %v327 = vand.u32 %v65, 4294901760
    %v328 = vsub.f32 %v65, %v327
    %v329 = vand.u32 %v328, 4294901760
    %330 = vmatpush.msra.mxu0 %v329
    %v331 = vand.u32 %v64, 4294901760
    %v332 = vsub.f32 %v64, %v331
    %v333 = vand.u32 %v332, 4294901760
    %334 = vmatpush.msra.mxu0 %v333
    %v335 = vand.u32 %v63, 4294901760
    %v336 = vsub.f32 %v63, %v335
    %v337 = vand.u32 %v336, 4294901760
    %338 = vmatpush.msra.mxu0 %v337
    %v339 = vand.u32 %v62, 4294901760
    %v340 = vsub.f32 %v62, %v339
    %v341 = vand.u32 %v340, 4294901760
    %342 = vmatpush.msra.mxu0 %v341
    %v343 = vand.u32 %v61, 4294901760
    %v344 = vsub.f32 %v61, %v343
    %v345 = vand.u32 %v344, 4294901760
    %346 = vmatpush.msra.mxu0 %v345
    %v347 = vand.u32 %v60, 4294901760
    %v348 = vsub.f32 %v60, %v347
    %v349 = vand.u32 %v348, 4294901760
    %350 = vmatpush.msra.mxu0 %v349
    %v351 = vand.u32 %v59, 4294901760
    %v352 = vsub.f32 %v59, %v351
    %v353 = vand.u32 %v352, 4294901760
    %354 = vmatpush.msra.mxu0 %v353
    %v355 = vand.u32 %v58, 4294901760
    %v356 = vsub.f32 %v58, %v355
    %v357 = vand.u32 %v356, 4294901760
    %358 = vmatpush.msra.mxu0 %v357
    %v359 = vand.u32 %v57, 4294901760
    %v360 = vsub.f32 %v57, %v359
    %v361 = vand.u32 %v360, 4294901760
    %362 = vmatpush.msra.mxu0 %v361
    %v363 = vand.u32 %v56, 4294901760
    %v364 = vsub.f32 %v56, %v363
    %v365 = vand.u32 %v364, 4294901760
    %366 = vmatpush.msra.mxu0 %v365
    %v367 = vand.u32 %v55, 4294901760
    %v368 = vsub.f32 %v55, %v367
    %v369 = vand.u32 %v368, 4294901760
    %370 = vmatpush.msra.mxu0 %v369
    %v371 = vand.u32 %v54, 4294901760
    %v372 = vsub.f32 %v54, %v371
    %v373 = vand.u32 %v372, 4294901760
    %374 = vmatpush.msra.mxu0 %v373
    %v375 = vand.u32 %v53, 4294901760
    %v376 = vsub.f32 %v53, %v375
    %v377 = vand.u32 %v376, 4294901760
    %378 = vmatpush.msra.mxu0 %v377
    %v379 = vand.u32 %v52, 4294901760
    %v380 = vsub.f32 %v52, %v379
    %v381 = vand.u32 %v380, 4294901760
    %382 = vmatpush.msra.mxu0 %v381
    %v383 = vand.u32 %v49, 4294901760
    %384 = vmatmul.f32.gmra.mxu0 %v383
    %v385 = vpop.f32.mrf.mxu0
    %v386 = vadd.f32 %v317, %v385
    %387 = vdwg.mxu0
    %v388 = vand.u32 %v67, 4294901760
    %389 = vmatpush.msra.mxu0 %v388
    %v390 = vand.u32 %v66, 4294901760
    %391 = vmatpush.msra.mxu0 %v390
    %v392 = vand.u32 %v65, 4294901760
    %393 = vmatpush.msra.mxu0 %v392
    %v394 = vand.u32 %v64, 4294901760
    %395 = vmatpush.msra.mxu0 %v394
    %v396 = vand.u32 %v63, 4294901760
    %397 = vmatpush.msra.mxu0 %v396
    %v398 = vand.u32 %v62, 4294901760
    %399 = vmatpush.msra.mxu0 %v398
    %v400 = vand.u32 %v61, 4294901760
    %401 = vmatpush.msra.mxu0 %v400
    %v402 = vand.u32 %v60, 4294901760
    %403 = vmatpush.msra.mxu0 %v402
    %v404 = vand.u32 %v59, 4294901760
    %405 = vmatpush.msra.mxu0 %v404
    %v406 = vand.u32 %v58, 4294901760
    %407 = vmatpush.msra.mxu0 %v406
    %v408 = vand.u32 %v57, 4294901760
    %409 = vmatpush.msra.mxu0 %v408
    %v410 = vand.u32 %v56, 4294901760
    %411 = vmatpush.msra.mxu0 %v410
    %v412 = vand.u32 %v55, 4294901760
    %413 = vmatpush.msra.mxu0 %v412
    %v414 = vand.u32 %v54, 4294901760
    %415 = vmatpush.msra.mxu0 %v414
    %v416 = vand.u32 %v53, 4294901760
    %417 = vmatpush.msra.mxu0 %v416
    %v418 = vand.u32 %v52, 4294901760
    %419 = vmatpush.msra.mxu0 %v418
    %v420 = vand.u32 %v49, 4294901760
    %421 = vmatmul.f32.gmra.mxu0 %v420
    %v422 = vpop.f32.mrf.mxu0
    %v423 = vadd.f32 %v386, %v422
    %424 = vdwg.mxu0
    %v425 = vand.u32 %v83, 4294901760
    %426 = vmatpush.msra.mxu0 %v425
    %v427 = vand.u32 %v82, 4294901760
    %428 = vmatpush.msra.mxu0 %v427
    %v429 = vand.u32 %v81, 4294901760
    %430 = vmatpush.msra.mxu0 %v429
    %v431 = vand.u32 %v80, 4294901760
    %432 = vmatpush.msra.mxu0 %v431
    %v433 = vand.u32 %v79, 4294901760
    %434 = vmatpush.msra.mxu0 %v433
    %v435 = vand.u32 %v78, 4294901760
    %436 = vmatpush.msra.mxu0 %v435
    %v437 = vand.u32 %v77, 4294901760
    %438 = vmatpush.msra.mxu0 %v437
    %v439 = vand.u32 %v76, 4294901760
    %440 = vmatpush.msra.mxu0 %v439
    %v441 = vand.u32 %v75, 4294901760
    %442 = vmatpush.msra.mxu0 %v441
    %v443 = vand.u32 %v74, 4294901760
    %444 = vmatpush.msra.mxu0 %v443
    %v445 = vand.u32 %v73, 4294901760
    %446 = vmatpush.msra.mxu0 %v445
    %v447 = vand.u32 %v72, 4294901760
    %448 = vmatpush.msra.mxu0 %v447
    %v449 = vand.u32 %v71, 4294901760
    %450 = vmatpush.msra.mxu0 %v449
    %v451 = vand.u32 %v70, 4294901760
    %452 = vmatpush.msra.mxu0 %v451
    %v453 = vand.u32 %v69, 4294901760
    %454 = vmatpush.msra.mxu0 %v453
    %v455 = vand.u32 %v68, 4294901760
    %456 = vmatpush.msra.mxu0 %v455
    %v457 = vand.u32 %v51, 4294901760
    %v458 = vsub.f32 %v51, %v457
    %v459 = vand.u32 %v458, 4294901760
    %v460 = vsub.f32 %v458, %v459
    %v461 = vand.u32 %v460, 4294901760
    %462 = vmatmul.f32.gmra.mxu0 %v461
    %v463 = vpop.f32.mrf.mxu0
    %v464 = vadd.f32 %v423, %v463
    %465 = vdwg.mxu0
    %v466 = vand.u32 %v83, 4294901760
    %v467 = vsub.f32 %v83, %v466
    %v468 = vand.u32 %v467, 4294901760
    %v469 = vsub.f32 %v467, %v468
    %v470 = vand.u32 %v469, 4294901760
    %471 = vmatpush.msra.mxu0 %v470
    %v472 = vand.u32 %v82, 4294901760
    %v473 = vsub.f32 %v82, %v472
    %v474 = vand.u32 %v473, 4294901760
    %v475 = vsub.f32 %v473, %v474
    %v476 = vand.u32 %v475, 4294901760
    %477 = vmatpush.msra.mxu0 %v476
    %v478 = vand.u32 %v81, 4294901760
    %v479 = vsub.f32 %v81, %v478
    %v480 = vand.u32 %v479, 4294901760
    %v481 = vsub.f32 %v479, %v480
    %v482 = vand.u32 %v481, 4294901760
    %483 = vmatpush.msra.mxu0 %v482
    %v484 = vand.u32 %v80, 4294901760
    %v485 = vsub.f32 %v80, %v484
    %v486 = vand.u32 %v485, 4294901760
    %v487 = vsub.f32 %v485, %v486
    %v488 = vand.u32 %v487, 4294901760
    %489 = vmatpush.msra.mxu0 %v488
    %v490 = vand.u32 %v79, 4294901760
    %v491 = vsub.f32 %v79, %v490
    %v492 = vand.u32 %v491, 4294901760
    %v493 = vsub.f32 %v491, %v492
    %v494 = vand.u32 %v493, 4294901760
    %495 = vmatpush.msra.mxu0 %v494
    %v496 = vand.u32 %v78, 4294901760
    %v497 = vsub.f32 %v78, %v496
    %v498 = vand.u32 %v497, 4294901760
    %v499 = vsub.f32 %v497, %v498
    %v500 = vand.u32 %v499, 4294901760
    %501 = vmatpush.msra.mxu0 %v500
    %v502 = vand.u32 %v77, 4294901760
    %v503 = vsub.f32 %v77, %v502
    %v504 = vand.u32 %v503, 4294901760
    %v505 = vsub.f32 %v503, %v504
    %v506 = vand.u32 %v505, 4294901760
    %507 = vmatpush.msra.mxu0 %v506
    %v508 = vand.u32 %v76, 4294901760
    %v509 = vsub.f32 %v76, %v508
    %v510 = vand.u32 %v509, 4294901760
    %v511 = vsub.f32 %v509, %v510
    %v512 = vand.u32 %v511, 4294901760
    %513 = vmatpush.msra.mxu0 %v512
    %v514 = vand.u32 %v75, 4294901760
    %v515 = vsub.f32 %v75, %v514
    %v516 = vand.u32 %v515, 4294901760
    %v517 = vsub.f32 %v515, %v516
    %v518 = vand.u32 %v517, 4294901760
    %519 = vmatpush.msra.mxu0 %v518
    %v520 = vand.u32 %v74, 4294901760
    %v521 = vsub.f32 %v74, %v520
    %v522 = vand.u32 %v521, 4294901760
    %v523 = vsub.f32 %v521, %v522
    %v524 = vand.u32 %v523, 4294901760
    %525 = vmatpush.msra.mxu0 %v524
    %v526 = vand.u32 %v73, 4294901760
    %v527 = vsub.f32 %v73, %v526
    %v528 = vand.u32 %v527, 4294901760
    %v529 = vsub.f32 %v527, %v528
    %v530 = vand.u32 %v529, 4294901760
    %531 = vmatpush.msra.mxu0 %v530
    %v532 = vand.u32 %v72, 4294901760
    %v533 = vsub.f32 %v72, %v532
    %v534 = vand.u32 %v533, 4294901760
    %v535 = vsub.f32 %v533, %v534
    %v536 = vand.u32 %v535, 4294901760
    %537 = vmatpush.msra.mxu0 %v536
    %v538 = vand.u32 %v71, 4294901760
    %v539 = vsub.f32 %v71, %v538
    %v540 = vand.u32 %v539, 4294901760
    %v541 = vsub.f32 %v539, %v540
    %v542 = vand.u32 %v541, 4294901760
    %543 = vmatpush.msra.mxu0 %v542
    %v544 = vand.u32 %v70, 4294901760
    %v545 = vsub.f32 %v70, %v544
    %v546 = vand.u32 %v545, 4294901760
    %v547 = vsub.f32 %v545, %v546
    %v548 = vand.u32 %v547, 4294901760
    %549 = vmatpush.msra.mxu0 %v548
    %v550 = vand.u32 %v69, 4294901760
    %v551 = vsub.f32 %v69, %v550
    %v552 = vand.u32 %v551, 4294901760
    %v553 = vsub.f32 %v551, %v552
    %v554 = vand.u32 %v553, 4294901760
    %555 = vmatpush.msra.mxu0 %v554
    %v556 = vand.u32 %v68, 4294901760
    %v557 = vsub.f32 %v68, %v556
    %v558 = vand.u32 %v557, 4294901760
    %v559 = vsub.f32 %v557, %v558
    %v560 = vand.u32 %v559, 4294901760
    %561 = vmatpush.msra.mxu0 %v560
    %v562 = vand.u32 %v51, 4294901760
    %563 = vmatmul.f32.gmra.mxu0 %v562
    %v564 = vpop.f32.mrf.mxu0
    %v565 = vadd.f32 %v464, %v564
    %566 = vdwg.mxu0
    %v567 = vand.u32 %v83, 4294901760
    %v568 = vsub.f32 %v83, %v567
    %569 = vmatpush.msra.mxu0 %v568
    %v570 = vand.u32 %v82, 4294901760
    %v571 = vsub.f32 %v82, %v570
    %572 = vmatpush.msra.mxu0 %v571
    %v573 = vand.u32 %v81, 4294901760
    %v574 = vsub.f32 %v81, %v573
    %575 = vmatpush.msra.mxu0 %v574
    %v576 = vand.u32 %v80, 4294901760
    %v577 = vsub.f32 %v80, %v576
    %578 = vmatpush.msra.mxu0 %v577
    %v579 = vand.u32 %v79, 4294901760
    %v580 = vsub.f32 %v79, %v579
    %581 = vmatpush.msra.mxu0 %v580
    %v582 = vand.u32 %v78, 4294901760
    %v583 = vsub.f32 %v78, %v582
    %584 = vmatpush.msra.mxu0 %v583
    %v585 = vand.u32 %v77, 4294901760
    %v586 = vsub.f32 %v77, %v585
    %587 = vmatpush.msra.mxu0 %v586
    %v588 = vand.u32 %v76, 4294901760
    %v589 = vsub.f32 %v76, %v588
    %590 = vmatpush.msra.mxu0 %v589
    %v591 = vand.u32 %v75, 4294901760
    %v592 = vsub.f32 %v75, %v591
    %593 = vmatpush.msra.mxu0 %v592
    %v594 = vand.u32 %v74, 4294901760
    %v595 = vsub.f32 %v74, %v594
    %596 = vmatpush.msra.mxu0 %v595
    %v597 = vand.u32 %v73, 4294901760
    %v598 = vsub.f32 %v73, %v597
    %599 = vmatpush.msra.mxu0 %v598
    %v600 = vand.u32 %v72, 4294901760
    %v601 = vsub.f32 %v72, %v600
    %602 = vmatpush.msra.mxu0 %v601
    %v603 = vand.u32 %v71, 4294901760
    %v604 = vsub.f32 %v71, %v603
    %605 = vmatpush.msra.mxu0 %v604
    %v606 = vand.u32 %v70, 4294901760
    %v607 = vsub.f32 %v70, %v606
    %608 = vmatpush.msra.mxu0 %v607
    %v609 = vand.u32 %v69, 4294901760
    %v610 = vsub.f32 %v69, %v609
    %611 = vmatpush.msra.mxu0 %v610
    %v612 = vand.u32 %v68, 4294901760
    %v613 = vsub.f32 %v68, %v612
    %614 = vmatpush.msra.mxu0 %v613
    %v615 = vand.u32 %v51, 4294901760
    %v616 = vsub.f32 %v51, %v615
    %617 = vmatmul.f32.gmra.mxu0 %v616
    %v618 = vpop.f32.mrf.mxu0
    %v619 = vadd.f32 %v565, %v618
    %620 = vdwg.mxu0
    %v621 = vand.u32 %v83, 4294901760
    %622 = vmatpush.msra.mxu0 %v621
    %v623 = vand.u32 %v82, 4294901760
    %624 = vmatpush.msra.mxu0 %v623
    %v625 = vand.u32 %v81, 4294901760
    %626 = vmatpush.msra.mxu0 %v625
    %v627 = vand.u32 %v80, 4294901760
    %628 = vmatpush.msra.mxu0 %v627
    %v629 = vand.u32 %v79, 4294901760
    %630 = vmatpush.msra.mxu0 %v629
    %v631 = vand.u32 %v78, 4294901760
    %632 = vmatpush.msra.mxu0 %v631
    %v633 = vand.u32 %v77, 4294901760
    %634 = vmatpush.msra.mxu0 %v633
    %v635 = vand.u32 %v76, 4294901760
    %636 = vmatpush.msra.mxu0 %v635
    %v637 = vand.u32 %v75, 4294901760
    %638 = vmatpush.msra.mxu0 %v637
    %v639 = vand.u32 %v74, 4294901760
    %640 = vmatpush.msra.mxu0 %v639
    %v641 = vand.u32 %v73, 4294901760
    %642 = vmatpush.msra.mxu0 %v641
    %v643 = vand.u32 %v72, 4294901760
    %644 = vmatpush.msra.mxu0 %v643
    %v645 = vand.u32 %v71, 4294901760
    %646 = vmatpush.msra.mxu0 %v645
    %v647 = vand.u32 %v70, 4294901760
    %648 = vmatpush.msra.mxu0 %v647
    %v649 = vand.u32 %v69, 4294901760
    %650 = vmatpush.msra.mxu0 %v649
    %v651 = vand.u32 %v68, 4294901760
    %652 = vmatpush.msra.mxu0 %v651
    %v653 = vand.u32 %v51, 4294901760
    %v654 = vsub.f32 %v51, %v653
    %v655 = vand.u32 %v654, 4294901760
    %656 = vmatmul.f32.gmra.mxu0 %v655
    %v657 = vpop.f32.mrf.mxu0
    %v658 = vadd.f32 %v619, %v657
    %659 = vdwg.mxu0
    %v660 = vand.u32 %v83, 4294901760
    %v661 = vsub.f32 %v83, %v660
    %v662 = vand.u32 %v661, 4294901760
    %663 = vmatpush.msra.mxu0 %v662
    %v664 = vand.u32 %v82, 4294901760
    %v665 = vsub.f32 %v82, %v664
    %v666 = vand.u32 %v665, 4294901760
    %667 = vmatpush.msra.mxu0 %v666
    %v668 = vand.u32 %v81, 4294901760
    %v669 = vsub.f32 %v81, %v668
    %v670 = vand.u32 %v669, 4294901760
    %671 = vmatpush.msra.mxu0 %v670
    %v672 = vand.u32 %v80, 4294901760
    %v673 = vsub.f32 %v80, %v672
    %v674 = vand.u32 %v673, 4294901760
    %675 = vmatpush.msra.mxu0 %v674
    %v676 = vand.u32 %v79, 4294901760
    %v677 = vsub.f32 %v79, %v676
    %v678 = vand.u32 %v677, 4294901760
    %679 = vmatpush.msra.mxu0 %v678
    %v680 = vand.u32 %v78, 4294901760
    %v681 = vsub.f32 %v78, %v680
    %v682 = vand.u32 %v681, 4294901760
    %683 = vmatpush.msra.mxu0 %v682
    %v684 = vand.u32 %v77, 4294901760
    %v685 = vsub.f32 %v77, %v684
    %v686 = vand.u32 %v685, 4294901760
    %687 = vmatpush.msra.mxu0 %v686
    %v688 = vand.u32 %v76, 4294901760
    %v689 = vsub.f32 %v76, %v688
    %v690 = vand.u32 %v689, 4294901760
    %691 = vmatpush.msra.mxu0 %v690
    %v692 = vand.u32 %v75, 4294901760
    %v693 = vsub.f32 %v75, %v692
    %v694 = vand.u32 %v693, 4294901760
    %695 = vmatpush.msra.mxu0 %v694
    %v696 = vand.u32 %v74, 4294901760
    %v697 = vsub.f32 %v74, %v696
    %v698 = vand.u32 %v697, 4294901760
    %699 = vmatpush.msra.mxu0 %v698
    %v700 = vand.u32 %v73, 4294901760
    %v701 = vsub.f32 %v73, %v700
    %v702 = vand.u32 %v701, 4294901760
    %703 = vmatpush.msra.mxu0 %v702
    %v704 = vand.u32 %v72, 4294901760
    %v705 = vsub.f32 %v72, %v704
    %v706 = vand.u32 %v705, 4294901760
    %707 = vmatpush.msra.mxu0 %v706
    %v708 = vand.u32 %v71, 4294901760
    %v709 = vsub.f32 %v71, %v708
    %v710 = vand.u32 %v709, 4294901760
    %711 = vmatpush.msra.mxu0 %v710
    %v712 = vand.u32 %v70, 4294901760
    %v713 = vsub.f32 %v70, %v712
    %v714 = vand.u32 %v713, 4294901760
    %715 = vmatpush.msra.mxu0 %v714
    %v716 = vand.u32 %v69, 4294901760
    %v717 = vsub.f32 %v69, %v716
    %v718 = vand.u32 %v717, 4294901760
    %719 = vmatpush.msra.mxu0 %v718
    %v720 = vand.u32 %v68, 4294901760
    %v721 = vsub.f32 %v68, %v720
    %v722 = vand.u32 %v721, 4294901760
    %723 = vmatpush.msra.mxu0 %v722
    %v724 = vand.u32 %v51, 4294901760
    %725 = vmatmul.f32.gmra.mxu0 %v724
    %v726 = vpop.f32.mrf.mxu0
    %v727 = vadd.f32 %v658, %v726
    %728 = vdwg.mxu0
    %v729 = vand.u32 %v83, 4294901760
    %730 = vmatpush.msra.mxu0 %v729
    %v731 = vand.u32 %v82, 4294901760
    %732 = vmatpush.msra.mxu0 %v731
    %v733 = vand.u32 %v81, 4294901760
    %734 = vmatpush.msra.mxu0 %v733
    %v735 = vand.u32 %v80, 4294901760
    %736 = vmatpush.msra.mxu0 %v735
    %v737 = vand.u32 %v79, 4294901760
    %738 = vmatpush.msra.mxu0 %v737
    %v739 = vand.u32 %v78, 4294901760
    %740 = vmatpush.msra.mxu0 %v739
    %v741 = vand.u32 %v77, 4294901760
    %742 = vmatpush.msra.mxu0 %v741
    %v743 = vand.u32 %v76, 4294901760
    %744 = vmatpush.msra.mxu0 %v743
    %v745 = vand.u32 %v75, 4294901760
    %746 = vmatpush.msra.mxu0 %v745
    %v747 = vand.u32 %v74, 4294901760
    %748 = vmatpush.msra.mxu0 %v747
    %v749 = vand.u32 %v73, 4294901760
    %750 = vmatpush.msra.mxu0 %v749
    %v751 = vand.u32 %v72, 4294901760
    %752 = vmatpush.msra.mxu0 %v751
    %v753 = vand.u32 %v71, 4294901760
    %754 = vmatpush.msra.mxu0 %v753
    %v755 = vand.u32 %v70, 4294901760
    %756 = vmatpush.msra.mxu0 %v755
    %v757 = vand.u32 %v69, 4294901760
    %758 = vmatpush.msra.mxu0 %v757
    %v759 = vand.u32 %v68, 4294901760
    %760 = vmatpush.msra.mxu0 %v759
    %v761 = vand.u32 %v51, 4294901760
    %762 = vmatmul.f32.gmra.mxu0 %v761
    %v763 = vpop.f32.mrf.mxu0
    %v764 = vadd.f32 %v727, %v763
    %765 = vdwg.mxu0
    %v766 = vrcp.pop %v764
    %v767 = vmul.f32 %v764, %v766
    %v768 = vsub.f32 1.0, %v767
    %v769 = vmul.f32 %v766, %v768
    %v770 = vadd.f32 %v766, %v769
    %vm771 = vweird.f32 %v764
    %vm772 = vweird.f32 %v766
    %vm773 = vmor %vm771, %vm772
    %v774 = vsel %vm773, %v766, %v770
    %v775 = vand.u32 2147483647, %v764
    %vm776 = vcmp.eq.f32.partialorder %v775, 8.507059e+37
    %v777 = vand.u32 %v764, 2147483648
    %v778 = vor.u32 1.1754944e-38, %v777
    %v779 = vsel %vm776, %v778, %v774
    %781 = vset.pattern.permute.xlu0 2
    %782 = vperm.xlu0 %781, %v779
    %v783 = vpop.permute.xlu0 %782
    %v785 = vmul.f32 %v764, %v783
    %vm786 = vcmask 15360
    %787 = vst.msk [vmem:[%s2] sm:$0xff] %vm786, %v785
    // Predicated region
    $region18: #{tpu_custom_call.1} parent=1 // pred_check
      _
    $region19: #{tpu_custom_call.1} parent=1 // pred_check_branch
      %789 = sbr.rel (0) target = $region21
    $region20: #{tpu_custom_call.1} parent=1 // pred_region
      _
    $region21: #{tpu_custom_call.1} parent=1 // pred_fallthru
      _
    // Predicated region
    $region22: #{tpu_custom_call.1} parent=1 // pred_check
      _
    $region23: #{tpu_custom_call.1} parent=1 // pred_check_branch
      %791 = sbr.rel (0) target = $region25
    $region24: #{tpu_custom_call.1} parent=1 // pred_region
      _
    $region25: #{tpu_custom_call.1} parent=1 // pred_fallthru
      _
    %792 = vsyncpa [#allocation3], 1
    %793 = vsyncpa [#allocation5], 1

</llo_original>
